<compile_context>
chip_gen: v7x
topology: tpu7x:2x2x1
jax: 0.10.0
libtpu: 0.0.40
codegen_flags: <defaults>
</compile_context>

<pallas_src>
import functools

import jax
import jax.numpy as jnp
from jax.experimental import pallas as pl
from jax.experimental.pallas import tpu as pltpu


# ---------------------------------------------------------------------------
# Pallas kernel: 'same'-padded Conv1d for one batch element, NCL layout.
# ---------------------------------------------------------------------------
def conv1d_kernel(x_ref, w_ref, b_ref, o_ref, xstk_ref, *, L, K, pad, Cin):
    # x_ref    : (Cin, L)        input block, native NCL layout (batch squeezed)
    # w_ref    : (Cout, K*Cin)   weight, pre-flattened (k-major, ci-minor)
    # b_ref    : (Cout, 1)       bias column
    # o_ref    : (Cout, L)       output block, native NCL layout
    # xstk_ref : (K*Cin, L)      VMEM scratch: K shifted copies of x stacked
    #                            along the contraction (sublane) axis.
    cdt = xstk_ref.dtype
    x = x_ref[...].astype(cdt)

    # Build the stacked shifted-tap slab.  Output column l of tap k reads
    # input column l + (k - pad); out-of-range columns are the 'same'
    # padding and are zero-filled explicitly (only 2*pad lanes per tap).
    for k in range(K):
        s = k - pad
        r0, r1 = k * Cin, (k + 1) * Cin
        if s == 0:
            xstk_ref[r0:r1, :] = x
        elif s < 0:
            z = -s
            xstk_ref[r0:r1, 0:z] = jnp.zeros((Cin, z), cdt)
            xstk_ref[r0:r1, z:L] = x[:, 0:L - z]
        else:
            xstk_ref[r0:r1, 0:L - s] = x[:, s:L]
            xstk_ref[r0:r1, L - s:L] = jnp.zeros((Cin, s), cdt)

    # One fused MXU contraction over (tap, channel), f32 accumulation.
    acc = jnp.dot(w_ref[...], xstk_ref[...],
                  preferred_element_type=jnp.float32)        # (Cout, L)
    acc = acc + b_ref[...].astype(jnp.float32)                # lane-broadcast bias
    o_ref[...] = acc.astype(o_ref.dtype)


# ---------------------------------------------------------------------------
# One-time parameter prep (hoisted out of the forward path).
# ---------------------------------------------------------------------------
def prep_conv1d_params(w_torch, b_torch, compute_dtype=None):
    """torch weight (Cout, Cin, K) -> (Cout, K*Cin), k-major / ci-minor;
    bias (Cout,) -> (Cout, 1) f32."""
    Cout, Cin, K = w_torch.shape
    if compute_dtype is None:
        compute_dtype = w_torch.dtype
    w_flat = (jnp.transpose(w_torch, (0, 2, 1))       # (Cout, K, Cin)
              .reshape(Cout, K * Cin)
              .astype(compute_dtype))
    b_col = b_torch.reshape(Cout, 1).astype(jnp.float32)
    return w_flat, b_col


# ---------------------------------------------------------------------------
# Forward pass (Pallas).
# ---------------------------------------------------------------------------
def conv1d_pallas(x_ncl, w_flat, b_col, *, kernel_size, stride=1,
                  compute_dtype=None):
    """x_ncl: (batch, in_channels, L) -> (batch, out_channels, L)."""
    assert stride == 1, "stride > 1 not implemented"           # TODO(synk)
    assert kernel_size % 2 == 1, "even kernel_size not implemented"  # TODO(synk)

    B, Cin, L = x_ncl.shape
    K = kernel_size
    pad = K // 2
    Cout = w_flat.shape[0]
    assert w_flat.shape == (Cout, K * Cin)
    if compute_dtype is None:
        compute_dtype = x_ncl.dtype

    kern = functools.partial(conv1d_kernel, L=L, K=K, pad=pad, Cin=Cin)

    return pl.pallas_call(
        kern,
        out_shape=jax.ShapeDtypeStruct((B, Cout, L), x_ncl.dtype),
        grid=(B,),
        in_specs=[
            pl.BlockSpec((pl.Squeezed(), Cin, L), lambda b: (b, 0, 0)),
            pl.BlockSpec((Cout, K * Cin), lambda b: (0, 0)),
            pl.BlockSpec((Cout, 1), lambda b: (0, 0)),
        ],
        out_specs=pl.BlockSpec((pl.Squeezed(), Cout, L), lambda b: (b, 0, 0)),
        scratch_shapes=[pltpu.VMEM((K * Cin, L), compute_dtype)],
        compiler_params=pltpu.CompilerParams(
            dimension_semantics=("parallel",)),
    )(x_ncl, w_flat, b_col)


# ---------------------------------------------------------------------------
# Deterministic params (PyTorch Conv1d init & layout) + pure-XLA reference.
# ---------------------------------------------------------------------------
def make_params(key, in_channels, out_channels, kernel_size):
    k1, k2 = jax.random.split(key)
    bound = 1.0 / jnp.sqrt(float(in_channels * kernel_size))
    w = jax.random.uniform(k1, (out_channels, in_channels, kernel_size),
                           jnp.float32, -bound, bound)
    b = jax.random.uniform(k2, (out_channels,), jnp.float32, -bound, bound)
    return w, b


def conv1d_ref(x_ncl, w, b, *, kernel_size, stride=1):
    pad = kernel_size // 2
    y = jax.lax.conv_general_dilated(
        x_ncl, w, (stride,), [(pad, pad)],
        dimension_numbers=("NCH", "OIH", "NCH"))
    return y + b[None, :, None]


if __name__ == "__main__":
    key = jax.random.PRNGKey(0)
    kx, kp = jax.random.split(key)

    batch, in_channels, out_channels = 2, 4, 8
    kernel_size, stride, L = 3, 1, 16

    x = jax.random.normal(kx, (batch, in_channels, L), jnp.float32)
    w, b = make_params(kp, in_channels, out_channels, kernel_size)
    w_flat, b_col = prep_conv1d_params(w, b)

    out = conv1d_pallas(x, w_flat, b_col, kernel_size=kernel_size, stride=stride)
    out = jax.block_until_ready(out)

    ref = jax.block_until_ready(
        conv1d_ref(x, w, b, kernel_size=kernel_size, stride=stride))

    assert out.shape == ref.shape == (batch, out_channels, L)
    assert jnp.allclose(out, ref, atol=1e-5, rtol=1e-5)

    print("KERNEL_OK")
</pallas_src>

<mosaic_0001>
module attributes {stable_mosaic.version = 11 : i64} {
  func.func @conv1d_kernel(%arg0: i32, %arg1: memref<1x4x16xf32, #tpu.memory_space<vmem>>, %arg2: memref<8x12xf32, #tpu.memory_space<vmem>>, %arg3: memref<8x1xf32, #tpu.memory_space<vmem>>, %arg4: memref<1x8x16xf32, #tpu.memory_space<vmem>>, %arg5: memref<12x16xf32, #tpu.memory_space<vmem>>) attributes {dimension_semantics = [#tpu.dimension_semantics<parallel>], iteration_bounds = array<i64: 2>, scalar_prefetch = 0 : i64, scratch_operands = 1 : i64, tpu.core_type = #tpu.core_type<tc>, window_params = [{transform_indices = @transform_0, window_bounds = array<i64: 1, 4, 16>}, {pipeline_mode = #tpu.pipeline_mode<synchronous>, transform_indices = @transform_1, window_bounds = array<i64: 8, 12>}, {pipeline_mode = #tpu.pipeline_mode<synchronous>, transform_indices = @transform_2, window_bounds = array<i64: 8, 1>}, {transform_indices = @transform_3, window_bounds = array<i64: 1, 8, 16>}]} {
    %c0 = arith.constant 0 : index
    %c0_0 = arith.constant 0 : index
    %c0_1 = arith.constant 0 : index
    %0 = vector.load %arg1[%c0, %c0_0, %c0_1] : memref<1x4x16xf32, #tpu.memory_space<vmem>>, vector<1x4x16xf32>
    %1 = vector.shape_cast %0 : vector<1x4x16xf32> to vector<4x16xf32>
    %cst = arith.constant 0.000000e+00 : f32
    %2 = vector.broadcast %cst : f32 to vector<4x1xf32>
    %c0_2 = arith.constant 0 : index
    %c0_3 = arith.constant 0 : index
    %3 = vector.load %arg5[%c0_2, %c0_3] : memref<12x16xf32, #tpu.memory_space<vmem>>, vector<4x1xf32>
    tpu.vector_store %arg5[%c0_2, %c0_3], %2 {strides = array<i32>} : memref<12x16xf32, #tpu.memory_space<vmem>>, vector<4x1xf32>,
    %4 = vector.extract_strided_slice %1 {offsets = [0, 0], sizes = [4, 15], strides = [1, 1]} : vector<4x16xf32> to vector<4x15xf32>
    %c0_4 = arith.constant 0 : index
    %c1 = arith.constant 1 : index
    %5 = vector.load %arg5[%c0_4, %c1] : memref<12x16xf32, #tpu.memory_space<vmem>>, vector<4x15xf32>
    tpu.vector_store %arg5[%c0_4, %c1], %4 {strides = array<i32>} : memref<12x16xf32, #tpu.memory_space<vmem>>, vector<4x15xf32>,
    %c4 = arith.constant 4 : index
    %c0_5 = arith.constant 0 : index
    %6 = vector.load %arg5[%c4, %c0_5] : memref<12x16xf32, #tpu.memory_space<vmem>>, vector<4x16xf32>
    tpu.vector_store %arg5[%c4, %c0_5], %1 {strides = array<i32>} : memref<12x16xf32, #tpu.memory_space<vmem>>, vector<4x16xf32>,
    %7 = vector.extract_strided_slice %1 {offsets = [0, 1], sizes = [4, 15], strides = [1, 1]} : vector<4x16xf32> to vector<4x15xf32>
    %c8 = arith.constant 8 : index
    %c0_6 = arith.constant 0 : index
    %8 = vector.load %arg5[%c8, %c0_6] : memref<12x16xf32, #tpu.memory_space<vmem>>, vector<4x15xf32>
    tpu.vector_store %arg5[%c8, %c0_6], %7 {strides = array<i32>} : memref<12x16xf32, #tpu.memory_space<vmem>>, vector<4x15xf32>,
    %cst_7 = arith.constant 0.000000e+00 : f32
    %9 = vector.broadcast %cst_7 : f32 to vector<4x1xf32>
    %c8_8 = arith.constant 8 : index
    %c15 = arith.constant 15 : index
    %10 = vector.load %arg5[%c8_8, %c15] : memref<12x16xf32, #tpu.memory_space<vmem>>, vector<4x1xf32>
    tpu.vector_store %arg5[%c8_8, %c15], %9 {strides = array<i32>} : memref<12x16xf32, #tpu.memory_space<vmem>>, vector<4x1xf32>,
    %c0_9 = arith.constant 0 : index
    %c0_10 = arith.constant 0 : index
    %11 = vector.load %arg2[%c0_9, %c0_10] : memref<8x12xf32, #tpu.memory_space<vmem>>, vector<8x12xf32>
    %c0_11 = arith.constant 0 : index
    %c0_12 = arith.constant 0 : index
    %12 = vector.load %arg5[%c0_11, %c0_12] : memref<12x16xf32, #tpu.memory_space<vmem>>, vector<12x16xf32>
    %cst_13 = arith.constant dense<0.000000e+00> : vector<8x16xf32>
    %13 = tpu.matmul %11, %12, %cst_13 {dimension_numbers = #tpu.dot_dimension_numbers<[1], [0], [0], [1], [0, 0, 1, 1], [], []>} : vector<8x12xf32>, vector<12x16xf32>, vector<8x16xf32> -> vector<8x16xf32>
    %c0_14 = arith.constant 0 : index
    %c0_15 = arith.constant 0 : index
    %14 = vector.load %arg3[%c0_14, %c0_15] : memref<8x1xf32, #tpu.memory_space<vmem>>, vector<8x1xf32>
    %15 = vector.broadcast %14 : vector<8x1xf32> to vector<8x16xf32>
    %16 = arith.addf %13, %15 : vector<8x16xf32>
    %c0_16 = arith.constant 0 : index
    %c0_17 = arith.constant 0 : index
    %c0_18 = arith.constant 0 : index
    %17 = vector.load %arg4[%c0_16, %c0_17, %c0_18] : memref<1x8x16xf32, #tpu.memory_space<vmem>>, vector<1x8x16xf32>
    %18 = vector.shape_cast %17 : vector<1x8x16xf32> to vector<8x16xf32>
    %19 = vector.shape_cast %16 : vector<8x16xf32> to vector<1x8x16xf32>
    tpu.vector_store %arg4[%c0_16, %c0_17, %c0_18], %19 {strides = array<i32>} : memref<1x8x16xf32, #tpu.memory_space<vmem>>, vector<1x8x16xf32>,
    return
  }
  func.func @transform_0(%arg0: i32) -> (i32, i32, i32) {
    %c0_i32 = arith.constant 0 : i32
    %c0_i32_0 = arith.constant 0 : i32
    %c0_i32_1 = arith.constant 0 : i32
    return %arg0, %c0_i32, %c0_i32_0 : i32, i32, i32
  }
  func.func @transform_1(%arg0: i32) -> (i32, i32) {
    %c0_i32 = arith.constant 0 : i32
    %c0_i32_0 = arith.constant 0 : i32
    %c0_i32_1 = arith.constant 0 : i32
    return %c0_i32, %c0_i32_0 : i32, i32
  }
  func.func @transform_2(%arg0: i32) -> (i32, i32) {
    %c0_i32 = arith.constant 0 : i32
    %c0_i32_0 = arith.constant 0 : i32
    %c0_i32_1 = arith.constant 0 : i32
    return %c0_i32, %c0_i32_0 : i32, i32
  }
  func.func @transform_3(%arg0: i32) -> (i32, i32, i32) {
    %c0_i32 = arith.constant 0 : i32
    %c0_i32_0 = arith.constant 0 : i32
    %c0_i32_1 = arith.constant 0 : i32
    return %arg0, %c0_i32, %c0_i32_0 : i32, i32, i32
  }
}

</mosaic_0001>

<llo_original>
// kernel: tpu_custom_call.1
$region0: #{tpu_custom_call.1}
  #allocation0 [shape = 'u32[]', space=smem, size = 0x4, offset = 0x4, fixed_abs, tag = 'smem constant byte address 0x4 - core index']
  #allocation1 [shape = 'u32[144,128]{1,0:T(1,128)}', space=vmem, size = 0x12000, scoped, tag = 'internal scratch']
  #allocation2 [shape = 'f32[12,16]{1,0:T(8,128)}', space=vmem, size = 0x2000, scoped, tag = 'scratch operand']
  %s0 = inlined_call_operand.vmem [shape: f32[2,4,16], index: 0, kind: input, shape index: {}]
  %s1 = inlined_call_operand.hbm [shape: f32[8,12], index: 1, kind: input, shape index: {}]
  %s2 = inlined_call_operand.vmem [shape: f32[8,1], index: 2, kind: input, shape index: {}]
  %s3 = inlined_call_operand.hbm [shape: f32[2,8,16], index: 3, kind: output, shape index: {}]
  %s4 = sld [smem:[#allocation0]]
  $region49: #{tpu_custom_call.1} parent=0
    _
  %s6 = ssub.s32 1, %s4
  %s7 = scalar_select 0, %s6, %s4
  $region1: #{tpu_custom_call.1} parent=0
    #allocation3 [shape = 'u8[4096]{0}', space=vmem, size = 0x1000, scoped, tag = 'input window, operand 1, single buffered']
    #allocation4 [shape = 's32[2]{0}', space=sflag, size = 0x8, scoped, tag = 'scoped memory for tpu_custom_call.1']
    #allocation5 [shape = 's32[2]{0}', space=sflag, size = 0x8, scoped, tag = 'scoped memory for tpu_custom_call.1']
    #allocation6 [shape = 'u8[8192]{0}', space=vmem, size = 0x2000, scoped, tag = 'output window, operand 0']
    %8 = vsyncpa [#allocation4], 0
    %9 = vsyncpa [#allocation5], 0
    %s10 = scalar_lea.sflag [#allocation5], 1
    %11 = vsyncpa %s10, 0
    loop: start=0, step=1, limit=4
    $region2: #{tpu_custom_call.1} parent=1 // loop_pre_header
      _
    $region3: #{tpu_custom_call.1} parent=1 // loop_header
      %s13 = sphi 0, %s17
      %p14 = scmp.ge.s32.totalorder %s13, 4
      %s23 = sphi 0, %s25
      %s26 = sphi 0, %s23
      %s27 = sphi 0, %s26
      %s43 = sphi 0, %s27
      %s47 = sphi 0, %s47
      %s49 = sphi 0, %s47
      %s50 = sphi 0, %s49
      %s64 = sphi 0, %s50
      %s68 = sphi 0, %s68
      %s70 = sphi 0, %s68
      %s71 = sphi 0, %s70
      %s85 = sphi 0, %s71
      %s91 = sphi 0, %s93
      %s94 = sphi 0, %s91
      %s95 = sphi 0, %s94
      %s111 = sphi 0, %s95
    $region4: #{tpu_custom_call.1} parent=1 // loop_header_branch
      %16 = sbr.rel (%p14) target = $region8
    $region5: #{tpu_custom_call.1} parent=1 // loop_body
      %s18 = ssub.s32 %s13, 1
      %s19 = ssub.s32 %s13, 2
      %s20 = sadd.s32 %s13, 1
      %s21 = ssub.s32 %s13, %s20
      %p22 = scmp.eq.s32.totalorder %s21, 0
      %s24 = sadd.s32 %s23, 1
      %s25 = scalar_select %p22, %s23, %s24
      %p28 = pneg %p22
      %p29 = scmp.eq.s32.totalorder %s13, 1
      %p30 = por %p28, %p29
      %p31 = scmp.ne.s32.totalorder %s23, %s26
      %p32 = scmp.eq.s32.totalorder %s13, 0
      %p33 = por %p31, %p32
      %p34 = scmp.ne.s32.totalorder %s23, %s26
      %p35 = scmp.eq.s32.totalorder %s18, 1
      %p36 = por %p34, %p35
      %p37 = scmp.ne.s32.totalorder %s26, %s27
      %p38 = scmp.eq.s32.totalorder %s18, 0
      %p39 = por %p37, %p38
      %p40 = scmp.ne.s32.totalorder %s26, %s27
      %p41 = scmp.eq.s32.totalorder %s19, 1
      %p42 = por %p40, %p41
      %p44 = scmp.ne.s32.totalorder %s27, %s43
      %p45 = scmp.eq.s32.totalorder %s19, 0
      %p46 = por %p44, %p45
      %s48 = sadd.s32 %s47, 1
      %p51 = scmp.eq.s32.totalorder %s13, 1
      %p52 = scmp.ne.s32.totalorder %s47, %s49
      %p53 = scmp.eq.s32.totalorder %s13, 0
      %p54 = por %p52, %p53
      %p55 = scmp.ne.s32.totalorder %s47, %s49
      %p56 = scmp.eq.s32.totalorder %s18, 1
      %p57 = por %p55, %p56
      %p58 = scmp.ne.s32.totalorder %s49, %s50
      %p59 = scmp.eq.s32.totalorder %s18, 0
      %p60 = por %p58, %p59
      %p61 = scmp.ne.s32.totalorder %s49, %s50
      %p62 = scmp.eq.s32.totalorder %s19, 1
      %p63 = por %p61, %p62
      %p65 = scmp.ne.s32.totalorder %s50, %s64
      %p66 = scmp.eq.s32.totalorder %s19, 0
      %p67 = por %p65, %p66
      %s69 = sadd.s32 %s68, 1
      %p72 = scmp.eq.s32.totalorder %s13, 1
      %p73 = scmp.ne.s32.totalorder %s68, %s70
      %p74 = scmp.eq.s32.totalorder %s13, 0
      %p75 = por %p73, %p74
      %p76 = scmp.ne.s32.totalorder %s68, %s70
      %p77 = scmp.eq.s32.totalorder %s18, 1
      %p78 = por %p76, %p77
      %p79 = scmp.ne.s32.totalorder %s70, %s71
      %p80 = scmp.eq.s32.totalorder %s18, 0
      %p81 = por %p79, %p80
      %p82 = scmp.ne.s32.totalorder %s70, %s71
      %p83 = scmp.eq.s32.totalorder %s19, 1
      %p84 = por %p82, %p83
      %p86 = scmp.ne.s32.totalorder %s71, %s85
      %p87 = scmp.eq.s32.totalorder %s19, 0
      %p88 = por %p86, %p87
      %s89 = ssub.s32 %s13, %s20
      %p90 = scmp.eq.s32.totalorder %s89, 0
      %s92 = sadd.s32 %s91, 1
      %s93 = scalar_select %p90, %s91, %s92
      %p96 = pneg %p90
      %p97 = scmp.eq.s32.totalorder %s13, 1
      %p98 = por %p96, %p97
      %p99 = scmp.ne.s32.totalorder %s91, %s94
      %p100 = scmp.eq.s32.totalorder %s13, 0
      %p101 = por %p99, %p100
      %p102 = scmp.ne.s32.totalorder %s91, %s94
      %p103 = scmp.eq.s32.totalorder %s18, 1
      %p104 = por %p102, %p103
      %p105 = scmp.ne.s32.totalorder %s94, %s95
      %p106 = scmp.eq.s32.totalorder %s18, 0
      %p107 = por %p105, %p106
      %p108 = scmp.ne.s32.totalorder %s94, %s95
      %p109 = scmp.eq.s32.totalorder %s19, 1
      %p110 = por %p108, %p109
      %p112 = scmp.ne.s32.totalorder %s95, %s111
      %p113 = scmp.eq.s32.totalorder %s19, 0
      %p114 = por %p112, %p113
      %p115 = scmp.le.s32.totalorder 1, %s13
      %p116 = scmp.lt.s32.totalorder %s13, 3
      %p117 = pnand %p115, %p116
      %p118 = pneg %p117
      // Predicated region
      $region9: #{tpu_custom_call.1} parent=5 // pred_check
        _
      $region10: #{tpu_custom_call.1} parent=5 // pred_check_branch
        %120 = sbr.rel (%p117) target = $region12
      $region11: #{tpu_custom_call.1} parent=5 // pred_region
        %s121 = ssub.s32 %s13, 1
        // Predicated region
        $region13: #{tpu_custom_call.1} parent=11 // pred_check
          %p122 = pneg %p60
        $region14: #{tpu_custom_call.1} parent=11 // pred_check_branch
          %124 = sbr.rel (%p122) target = $region16
        $region15: #{tpu_custom_call.1} parent=11 // pred_region
          %s126 = ssub.s32 128, 128
          %127 = vsyncadd [#allocation4], %s126
          %s129 = sshll.u32 [#allocation3], 4
          %s130 = int_to_ptr.vmem [resolvable:$true] %s129
          %132 = dma.hbm_to_vmem [thread:$0]  %s1, 128, %s130, [#allocation4]
        $region16: #{tpu_custom_call.1} parent=11 // pred_fallthru
          _
        // Predicated region
        $region17: #{tpu_custom_call.1} parent=11 // pred_check
          %p133 = pneg %p81
        $region18: #{tpu_custom_call.1} parent=11 // pred_check_branch
          %135 = sbr.rel (%p133) target = $region20
        $region19: #{tpu_custom_call.1} parent=11 // pred_region
          _
        $region20: #{tpu_custom_call.1} parent=11 // pred_fallthru
          _
      $region12: #{tpu_custom_call.1} parent=5 // pred_fallthru
        _
      %p136 = scmp.lt.s32.totalorder %s13, 2
      // Predicated region
      $region21: #{tpu_custom_call.1} parent=5 // pred_check
        %p137 = pneg %p136
      $region22: #{tpu_custom_call.1} parent=5 // pred_check_branch
        %139 = sbr.rel (%p137) target = $region24
      $region23: #{tpu_custom_call.1} parent=5 // pred_region
        // Predicated region
        $region25: #{tpu_custom_call.1} parent=23 // pred_check
          %p140 = pneg %p33
        $region26: #{tpu_custom_call.1} parent=23 // pred_check_branch
          %142 = sbr.rel (%p140) target = $region28
        $region27: #{tpu_custom_call.1} parent=23 // pred_region
          %p143 = scmp.lt.s32.totalorder %s13, 1
          %s144 = scalar_select %p143, %s13, 1
          %s145 = smul.addr %s144, 4
          %s146 = scalar_lea.vmem %s0, %s145
        $region28: #{tpu_custom_call.1} parent=23 // pred_fallthru
          _
      $region24: #{tpu_custom_call.1} parent=5 // pred_fallthru
        _
      %p147 = scmp.le.s32.totalorder 1, %s13
      %p148 = scmp.lt.s32.totalorder %s13, 3
      %p149 = pnand %p147, %p148
      %p150 = pneg %p149
      // Predicated region
      $region29: #{tpu_custom_call.1} parent=5 // pred_check
        _
      $region30: #{tpu_custom_call.1} parent=5 // pred_check_branch
        %152 = sbr.rel (%p149) target = $region32
      $region31: #{tpu_custom_call.1} parent=5 // pred_region
        %s153 = ssub.s32 %s13, 1
        // Predicated region
        $region33: #{tpu_custom_call.1} parent=31 // pred_check
          %p154 = pneg %p60
        $region34: #{tpu_custom_call.1} parent=31 // pred_check_branch
          %156 = sbr.rel (%p154) target = $region36
        $region35: #{tpu_custom_call.1} parent=31 // pred_region
          %157 = dma.done [#allocation4], 128
        $region36: #{tpu_custom_call.1} parent=31 // pred_fallthru
          _
        %p158 = scmp.lt.s32.totalorder %s18, 1
        %s159 = scalar_select %p158, %s18, 1
        %s160 = smul.addr %s159, 4
        %s161 = scalar_lea.vmem %s0, %s160
        %p162 = pneg %p39
        %p163 = pneg %p36
        %p164 = pneg %p60
        %p165 = pneg %p57
        %p166 = pneg %p81
        %p167 = pneg %p78
        %p168 = pneg %p107
        %p169 = pneg %p104
        %s170 = sand.u32 %s94, 1
        %s171 = scalar_lea.sflag [#allocation5], %s170
        %s172 = sand.u32 %s94, 1
        %s173 = smul.addr %s172, 8
        %s174 = scalar_lea.vmem [#allocation6], %s173
        %p175 = scmp.lt.s32.totalorder %s18, 1
        %s176 = scalar_select %p175, %s18, 1
        %s177 = smul.addr %s176, 4
        %s178 = scalar_lea.vmem %s0, %s177
        %v179 = vld [vmem:[%s178] sm:$0xf]
        %vm180 = vcmask 3072
        %181 = vst.msk [vmem:[#allocation2] sm:$0xf] %vm180, 0.0
        %183 = vrot.lane.b32.xlu0 %v179, 1
        %v184 = vpop.permute.xlu0 %183
        %vm186 = vcmask 125960
        %187 = vst.msk [vmem:[#allocation2] sm:$0xf] %vm186, %v184
        %vm188 = vcmask 125952
        %189 = vst.msk [vmem:[#allocation2 + $0x4] sm:$0xf] %vm188, %v179
        %190 = vrot.lane.b32.xlu0 %v179, 127
        %v191 = vpop.permute.xlu0 %190
        %vm193 = vcmask 117760
        %194 = vst.msk [vmem:[#allocation2 + $0x8] sm:$0xf] %vm193, %v191
        %vm195 = vcmask 126072
        %196 = vst.msk [vmem:[#allocation2 + $0x8] sm:$0xf] %vm195, 0.0
        %v197 = vld [vmem:[#allocation3] sm:$0xff]
        %v198 = vld [vmem:[#allocation2] sm:$0xff]
        %v199 = vld [vmem:[#allocation2 + $0x8] sm:$0xf]
        %v200 = vld [vmem:[%s2] sm:$0xff]
        %202 = vset.pattern.permute.xlu0 0
        %203 = vperm.xlu0 %202, %v200
        %v204 = vpop.permute.xlu0 %203
        %vm206 = vcmask 97280
        %v208 = vsel %vm206, %v197, 0
        %vm210 = vcmask 1043456
        %v212 = vsel %vm210, %v199, 0
        %214 = vmatprep.subr.mxu0 0.0
        %215 = vmatpush1.msra.mxu0 %v198
        %216 = vmatprep.subr.mxu0 0.0
        %217 = vmatpush1.msra.mxu0 %v212
        %218 = vmatprep.subr.mxu0 0.0
        %219 = vmatpush1.msra.mxu0 0.0
        %220 = vmatprep.subr.mxu0 0.0
        %221 = vmatpush1.msra.mxu0 0.0
        %222 = vmatprep.subr.mxu0 0.0
        %223 = vmatpush1.msra.mxu0 0.0
        %224 = vmatprep.subr.mxu0 0.0
        %225 = vmatpush1.msra.mxu0 0.0
        %226 = vmatprep.subr.mxu0 0.0
        %227 = vmatpush1.msra.mxu0 0.0
        %228 = vmatprep.subr.mxu0 0.0
        %229 = vmatpush1.msra.mxu0 0.0
        %230 = vmatprep.subr.mxu0 0.0
        %231 = vmatpush1.msra.mxu0 0.0
        %232 = vmatprep.subr.mxu0 0.0
        %233 = vmatpush1.msra.mxu0 0.0
        %234 = vmatprep.subr.mxu0 0.0
        %235 = vmatpush1.msra.mxu0 0.0
        %236 = vmatprep.subr.mxu0 0.0
        %237 = vmatpush1.msra.mxu0 0.0
        %238 = vmatprep.subr.mxu0 0.0
        %239 = vmatpush1.msra.mxu0 0.0
        %240 = vmatprep.subr.mxu0 0.0
        %241 = vmatpush1.msra.mxu0 0.0
        %242 = vmatprep.subr.mxu0 0.0
        %243 = vmatpush1.msra.mxu0 0.0
        %244 = vmatprep.subr.mxu0 0.0
        %245 = vmatpush1.msra.mxu0 0.0
        %246 = vmatprep.subr.mxu0 0.0
        %247 = vmatpush1.msra.mxu0 0.0
        %248 = vmatprep.subr.mxu0 0.0
        %249 = vmatpush1.msra.mxu0 0.0
        %250 = vmatprep.subr.mxu0 0.0
        %251 = vmatpush1.msra.mxu0 0.0
        %252 = vmatprep.subr.mxu0 0.0
        %253 = vmatpush1.msra.mxu0 0.0
        %254 = vmatprep.subr.mxu0 0.0
        %255 = vmatpush1.msra.mxu0 0.0
        %256 = vmatprep.subr.mxu0 0.0
        %257 = vmatpush1.msra.mxu0 0.0
        %258 = vmatprep.subr.mxu0 0.0
        %259 = vmatpush1.msra.mxu0 0.0
        %260 = vmatprep.subr.mxu0 0.0
        %261 = vmatpush1.msra.mxu0 0.0
        %262 = vmatprep.subr.mxu0 0.0
        %263 = vmatpush1.msra.mxu0 0.0
        %264 = vmatprep.subr.mxu0 0.0
        %265 = vmatpush1.msra.mxu0 0.0
        %266 = vmatprep.subr.mxu0 0.0
        %267 = vmatpush1.msra.mxu0 0.0
        %268 = vmatprep.subr.mxu0 0.0
        %269 = vmatpush1.msra.mxu0 0.0
        %270 = vmatprep.subr.mxu0 0.0
        %271 = vmatpush1.msra.mxu0 0.0
        %272 = vmatprep.subr.mxu0 0.0
        %273 = vmatpush1.msra.mxu0 0.0
        %274 = vmatprep.subr.mxu0 0.0
        %275 = vmatpush1.msra.mxu0 0.0
        %276 = vmatprep.subr.mxu0 0.0
        %277 = vmatpush1.msra.mxu0 0.0
        %278 = vmatprep.mubr.f32.mxu0 0.0
        %279 = vmatmul.mubr.f32.gmra.mrb[0].mxu0 %v208
        %v280 = vpop.f32.mrb[0].mxu0
        %v281 = vadd.f32 %v204, %v280
        %v282 = vpop.f32.mrb[0].mxu0
        %283 = vdwg.mxu0
        %vm284 = vcmask 130048
        %285 = vst.msk [vmem:[%s174] sm:$0xff] %vm284, %v281
        %s286 = sand.u32 %s94, 1
        %s287 = scalar_lea.sflag [#allocation5], %s286
        %s288 = sand.u32 %s94, 1
        %s289 = smul.addr %s288, 8
        %s290 = scalar_lea.vmem [#allocation6], %s289
        // Predicated region
        $region37: #{tpu_custom_call.1} parent=31 // pred_check
          %p291 = pneg %p104
        $region38: #{tpu_custom_call.1} parent=31 // pred_check_branch
          %293 = sbr.rel (%p291) target = $region40
        $region39: #{tpu_custom_call.1} parent=31 // pred_region
          %s295 = ssub.s32 128, 128
          %296 = vsyncadd %s287, %s295
          %s297 = smul.addr %s18, 128
          %s298 = scalar_lea.hbm %s3, %s297
          %s300 = sshll.u32 %s290, 4
          %s301 = int_to_ptr.vmem [resolvable:$true] %s300
          %303 = dma.vmem_to_hbm [thread:$0]  %s301, 128, %s298, %s287
        $region40: #{tpu_custom_call.1} parent=31 // pred_fallthru
          _
      $region32: #{tpu_custom_call.1} parent=5 // pred_fallthru
        _
      %p304 = scmp.le.s32.totalorder 2, %s13
      // Predicated region
      $region41: #{tpu_custom_call.1} parent=5 // pred_check
        %p305 = pneg %p304
      $region42: #{tpu_custom_call.1} parent=5 // pred_check_branch
        %307 = sbr.rel (%p305) target = $region44
      $region43: #{tpu_custom_call.1} parent=5 // pred_region
        %s308 = ssub.s32 %s13, 2
        // Predicated region
        $region45: #{tpu_custom_call.1} parent=43 // pred_check
          %p309 = pneg %p110
        $region46: #{tpu_custom_call.1} parent=43 // pred_check_branch
          %311 = sbr.rel (%p309) target = $region48
        $region47: #{tpu_custom_call.1} parent=43 // pred_region
          %s312 = sand.u32 %s95, 1
          %s313 = scalar_lea.sflag [#allocation5], %s312
          %s314 = sand.u32 %s95, 1
          %s315 = smul.addr %s314, 8
          %s316 = scalar_lea.vmem [#allocation6], %s315
          %317 = dma.done %s313, 128
        $region48: #{tpu_custom_call.1} parent=43 // pred_fallthru
          _
      $region44: #{tpu_custom_call.1} parent=5 // pred_fallthru
        _
    $region6: #{tpu_custom_call.1} parent=1 // loop_footer
      %s17 = sadd.s32 1, %s13
    $region7: #{tpu_custom_call.1} parent=1 // loop_footer_branch
      %12 = sbr.rel target = $region3
    $region8: #{tpu_custom_call.1} parent=1 // loop_exit
      _
    %318 = vsyncpa [#allocation4], 1
    %s319 = scalar_lea.sflag [#allocation4], 1
    %320 = vsyncpa %s319, 1
    %321 = vsyncpa [#allocation5], 1
    %s322 = scalar_lea.sflag [#allocation5], 1
    %323 = vsyncpa %s322, 1

</llo_original>
